<compile_context>
chip_gen: v5e
topology: v5e:2x2
jax: 0.10.0
libtpu: 0.0.40
codegen_flags: <defaults>
</compile_context>

<pallas_src>
import numpy as np

import jax
import jax.numpy as jnp
from jax import lax
from jax.experimental import pallas as pl
from jax.experimental.pallas import tpu as pltpu

H_IN, W_IN = 4, 10            # implied by fc1 in_features = 3*5*8
TN_MAX = 4096                 # max batch tile (lanes) per grid step
TN_SINGLE_STEP = 1024         # above this, force >= 2 grid steps (v7x dual TC)

# Feature sizes (feature-major: activations are (features, tile)).
F_IN = 1 * H_IN * W_IN        # 40
F1 = 2 * 4 * 8                # 64   conv1 out
F2 = 4 * 4 * 6                # 96   conv2 out
F3 = 8 * 3 * 5                # 120  conv3 out (== fc1 in_features)
FC1_PAD = 128                 # fc1 out 100 -> 128
FC2_PAD = 32                  # fc2 out 20  -> 32


def _round_up(a, b):
    return (a + b - 1) // b * b


def _make_kernel(tn, n_sub):
    """Build the fused forward kernel for a batch tile of `tn` lanes."""
    tn_sub = tn // n_sub

    def kernel(
        x_ref,                    # VMEM (tn, F_IN)          f32, batch-major
        m1_ref, b1_ref,           # VMEM (F1, F_IN)   bf16,  (F1, 1)      f32
        m2_ref, b2_ref,           # VMEM (F2, F1)     bf16,  (F2, 1)      f32
        m3_ref, b3_ref,           # VMEM (F3, F2)     bf16,  (F3, 1)      f32
        fw1_ref, fb1_ref,         # VMEM (FC1_PAD, F3)      bf16, (FC1_PAD, 1) f32
        fw2_ref, fb2_ref,         # VMEM (FC2_PAD, FC1_PAD) bf16, (FC2_PAD, 1) f32
        fw3t_ref, fb3_ref,        # VMEM (FC2_PAD, 1) f32,  (1, 1) f32
        out_ref,                  # VMEM (1, tn) f32
    ):
        def dense(w_ref, b_ref, act_bf16):
            # bf16 MXU matmul, f32 accumulate; bias add in f32 on the VPU.
            y = jnp.dot(w_ref[...], act_bf16, preferred_element_type=jnp.float32)
            return y + b_ref[...]

        # Two independent lane sub-tiles (statically unrolled) so the LLO
        # scheduler can interleave one chain's MXU pushes/drains under the other.
        for s in range(n_sub):
            lo = s * tn_sub
            xs = x_ref[pl.ds(lo, tn_sub), :].astype(jnp.bfloat16)   # (tn_sub, F_IN)

            # conv1 with the batch-major -> feature-major transpose folded in:
            # contract the last axis of both operands => (F1, tn_sub).
            a = lax.dot_general(
                m1_ref[...], xs, (((1,), (1,)), ((), ())),
                preferred_element_type=jnp.float32) + b1_ref[...]
            a = jnp.maximum(a, 0.0).astype(jnp.bfloat16)                 # conv1
            a = jnp.maximum(dense(m2_ref, b2_ref, a), 0.0).astype(jnp.bfloat16)   # conv2
            a = jnp.maximum(dense(m3_ref, b3_ref, a), 0.0).astype(jnp.bfloat16)   # conv3
            a = jnp.maximum(dense(fw1_ref, fb1_ref, a), 0.0).astype(jnp.bfloat16) # fc1
            # dropout(p=0.1): identity at inference.
            # TODO(synk): training-mode dropout (pltpu.prng_random_bits mask) not emitted.
            a = jnp.maximum(dense(fw2_ref, fb2_ref, a), 0.0)             # fc2, f32

            # fc3 (20 -> 1) on the VPU/XLU instead of the MXU:
            # broadcast-multiply by the fw3 column, reduce over the sublane axis.
            z = jnp.sum(a * fw3t_ref[...], axis=0, keepdims=True) + fb3_ref[...]
            out_ref[0:1, pl.ds(lo, tn_sub)] = z

    return kernel


# ----------------------------------------------------------------------------
# One-time, host-side weight repacking (hoisted out of the per-call jit path).
# ----------------------------------------------------------------------------
def _conv_as_matrix_np(w, in_chw, out_chw):
    """OIHW conv weight -> left-multiply matrix M with out_flat = M @ in_flat.

    Flatten order of both sides matches PyTorch .view: (C, H, W).
    """
    w = np.asarray(w, np.float32)
    c_out, c_in, k_h, k_w = w.shape
    _, h_in, w_in = in_chw
    _, h_out, w_out = out_chw
    m = np.zeros((c_out * h_out * w_out, c_in * h_in * w_in), np.float32)
    for co in range(c_out):
        for ho in range(h_out):
            for wo in range(w_out):
                r = (co * h_out + ho) * w_out + wo
                for ci in range(c_in):
                    for dh in range(k_h):
                        for dw in range(k_w):
                            c = (ci * h_in + ho + dh) * w_in + wo + dw
                            m[r, c] = w[co, ci, dh, dw]
    return m


def _pad_to_np(a, shape):
    out = np.zeros(shape, np.float32)
    out[: a.shape[0], : a.shape[1]] = a
    return out


def pack_params(params):
    """Repack PyTorch-layout params into kernel operands.  Call ONCE per model."""
    p = {k: np.asarray(v, np.float32) for k, v in params.items()}

    m1 = _conv_as_matrix_np(p["w1"], (1, 4, 10), (2, 4, 8))      # (64, 40)
    m2 = _conv_as_matrix_np(p["w2"], (2, 4, 8), (4, 4, 6))       # (96, 64)
    m3 = _conv_as_matrix_np(p["w3"], (4, 4, 6), (8, 3, 5))       # (120, 96)
    b1 = np.repeat(p["b1"], 4 * 8).reshape(F1, 1)
    b2 = np.repeat(p["b2"], 4 * 6).reshape(F2, 1)
    b3 = np.repeat(p["b3"], 3 * 5).reshape(F3, 1)

    fw1 = _pad_to_np(p["fw1"], (FC1_PAD, F3))                    # (128, 120)
    fb1 = _pad_to_np(p["fb1"].reshape(-1, 1), (FC1_PAD, 1))
    fw2 = _pad_to_np(p["fw2"], (FC2_PAD, FC1_PAD))               # (32, 128)
    fb2 = _pad_to_np(p["fb2"].reshape(-1, 1), (FC2_PAD, 1))
    fw3t = _pad_to_np(p["fw3"].T, (FC2_PAD, 1))                  # (32, 1), rows 20.. zero
    fb3 = p["fb3"].reshape(1, 1)

    bf = lambda a: jnp.asarray(a, jnp.bfloat16)
    f32 = lambda a: jnp.asarray(a, jnp.float32)
    return (
        bf(m1), f32(b1), bf(m2), f32(b2), bf(m3), f32(b3),
        bf(fw1), f32(fb1), bf(fw2), f32(fb2), f32(fw3t), f32(fb3),
    )


def init_params(key):
    """Deterministic PyTorch-layout parameters (Kaiming-uniform-ish bounds)."""
    ks = jax.random.split(key, 12)

    def u(k, shape, fan_in):
        bound = 1.0 / float(fan_in) ** 0.5
        return jax.random.uniform(k, shape, jnp.float32, -bound, bound)

    return dict(
        w1=u(ks[0], (2, 1, 1, 3), 3),   b1=u(ks[1], (2,), 3),
        w2=u(ks[2], (4, 2, 1, 3), 6),   b2=u(ks[3], (4,), 6),
        w3=u(ks[4], (8, 4, 2, 2), 16),  b3=u(ks[5], (8,), 16),
        fw1=u(ks[6], (100, 120), 120),  fb1=u(ks[7], (100,), 120),
        fw2=u(ks[8], (20, 100), 100),   fb2=u(ks[9], (20,), 100),
        fw3=u(ks[10], (1, 20), 20),     fb3=u(ks[11], (1,), 20),
    )


def _choose_tiling(n):
    n128 = _round_up(n, 128)
    if n128 <= TN_SINGLE_STEP:
        tn = n128                                   # one step is enough
    else:
        # >= 2 grid steps so both v7x TensorCores get work; cap tile at TN_MAX.
        tn = min(TN_MAX, _round_up((n128 + 1) // 2, 128))
    n_pad = _round_up(n, tn)
    n_sub = 2 if (tn % 256 == 0) else 1             # keep 128-lane alignment per sub-tile
    return tn, n_pad, n_sub


@jax.jit
def cnn_forward_pallas(x_nchw, packed):
    n = x_nchw.shape[0]
    assert x_nchw.shape[1:] == (1, H_IN, W_IN)

    tn, n_pad, n_sub = _choose_tiling(n)
    grid = (n_pad // tn,)

    # Input stays batch-major f32; only a (cheap) batch zero-pad when needed.
    x2d = x_nchw.reshape(n, F_IN)
    if n_pad != n:
        x2d = jnp.pad(x2d, ((0, n_pad - n), (0, 0)))

    operands = (x2d,) + tuple(packed)

    in_specs = [pl.BlockSpec((tn, F_IN), lambda i: (i, 0))]
    # Weights/biases: constant index_map -> DMA'd once, resident across steps.
    in_specs += [pl.BlockSpec(op.shape, lambda i: (0, 0)) for op in packed]

    flops = 2 * n_pad * (F_IN * F1 + F1 * F2 + F2 * F3 +
                         F3 * FC1_PAD + FC1_PAD * FC2_PAD + FC2_PAD * 1)
    bytes_accessed = (n_pad * F_IN * 4 + n_pad * 4 +
                      sum(int(a.size) * a.dtype.itemsize for a in packed))

    out = pl.pallas_call(
        _make_kernel(tn, n_sub),
        out_shape=jax.ShapeDtypeStruct((1, n_pad), jnp.float32),
        grid=grid,
        in_specs=in_specs,
        out_specs=pl.BlockSpec((1, tn), lambda i: (0, i)),
        compiler_params=pltpu.CompilerParams(
            dimension_semantics=("parallel",),
            vmem_limit_bytes=32 * 1024 * 1024),
        cost_estimate=pl.CostEstimate(
            flops=flops, transcendentals=0, bytes_accessed=bytes_accessed),
    )(*operands)

    return out[0, :n].reshape(n, 1)


def cnn_forward_reference(x_nchw, params, match_bf16=True):
    """Pure-JAX reference matching the PyTorch forward (eval mode).

    With match_bf16=True it mirrors the kernel's bf16 matmul operands / f32
    accumulation (fc3 stays f32, as in the kernel) so the comparison isolates
    kernel plumbing errors.
    """
    cast = (lambda a: a.astype(jnp.bfloat16)) if match_bf16 else (lambda a: a)

    def conv(x, w, b):
        y = lax.conv_general_dilated(
            cast(x), cast(w), window_strides=(1, 1), padding="VALID",
            dimension_numbers=("NCHW", "OIHW", "NCHW"),
            preferred_element_type=jnp.float32)
        return jnp.maximum(y + b[None, :, None, None], 0.0)

    h = conv(x_nchw.astype(jnp.float32), params["w1"], params["b1"])
    h = conv(h, params["w2"], params["b2"])
    h = conv(h, params["w3"], params["b3"])
    flat = h.reshape(h.shape[0], -1)                     # (N, 120), (C,H,W) order
    z = jnp.maximum(jnp.dot(cast(flat), cast(params["fw1"]).T,
                            preferred_element_type=jnp.float32) + params["fb1"], 0.0)
    # dropout(p=0.1) = identity in eval mode
    z = jnp.maximum(jnp.dot(cast(z), cast(params["fw2"]).T,
                            preferred_element_type=jnp.float32) + params["fb2"], 0.0)
    # fc3 in f32 (the kernel computes it on the VPU in f32).
    return jnp.dot(z, params["fw3"].T) + params["fb3"]


if __name__ == "__main__":
    key = jax.random.PRNGKey(0)
    pkey, xkey, xkey2 = jax.random.split(key, 3)
    params = init_params(pkey)
    packed = pack_params(params)          # one-time host-side repack

    # Small demo batch (NCHW, C=1, spatial 4x10 as implied by fc1).
    x = jax.random.normal(xkey, (8, 1, H_IN, W_IN), jnp.float32)
    y = jax.block_until_ready(cnn_forward_pallas(x, packed))
    y_ref = cnn_forward_reference(x, params)
    assert y.shape == (8, 1), y.shape
    err = float(jnp.max(jnp.abs(y - y_ref)))
    assert err < 1e-2, err

    # Larger, non-multiple batch: exercises zero-padding, a 2-step grid
    # (both v7x TensorCores) and the in-kernel 2-way lane sub-tiling.
    x2 = jax.random.normal(xkey2, (1500, 1, H_IN, W_IN), jnp.float32)
    y2 = jax.block_until_ready(cnn_forward_pallas(x2, packed))
    y2_ref = cnn_forward_reference(x2, params)
    assert y2.shape == (1500, 1), y2.shape
    err2 = float(jnp.max(jnp.abs(y2 - y2_ref)))
    assert err2 < 1e-2, err2

    print("KERNEL_OK")
</pallas_src>

<mosaic_0001>
module attributes {stable_mosaic.version = 11 : i64} {
  func.func @kernel(%arg0: i32, %arg1: memref<128x40xf32, #tpu.memory_space<vmem>>, %arg2: memref<64x40xbf16, #tpu.memory_space<vmem>>, %arg3: memref<64x1xf32, #tpu.memory_space<vmem>>, %arg4: memref<96x64xbf16, #tpu.memory_space<vmem>>, %arg5: memref<96x1xf32, #tpu.memory_space<vmem>>, %arg6: memref<120x96xbf16, #tpu.memory_space<vmem>>, %arg7: memref<120x1xf32, #tpu.memory_space<vmem>>, %arg8: memref<128x120xbf16, #tpu.memory_space<vmem>>, %arg9: memref<128x1xf32, #tpu.memory_space<vmem>>, %arg10: memref<32x128xbf16, #tpu.memory_space<vmem>>, %arg11: memref<32x1xf32, #tpu.memory_space<vmem>>, %arg12: memref<32x1xf32, #tpu.memory_space<vmem>>, %arg13: memref<1x1xf32, #tpu.memory_space<vmem>>, %arg14: memref<1x128xf32, #tpu.memory_space<vmem>>) attributes {dimension_semantics = [#tpu.dimension_semantics<parallel>], iteration_bounds = array<i64: 1>, scalar_prefetch = 0 : i64, scratch_operands = 0 : i64, tpu.core_type = #tpu.core_type<tc>, window_params = [{transform_indices = @transform_0, window_bounds = array<i64: 128, 40>}, {pipeline_mode = #tpu.pipeline_mode<synchronous>, transform_indices = @transform_1, window_bounds = array<i64: 64, 40>}, {pipeline_mode = #tpu.pipeline_mode<synchronous>, transform_indices = @transform_2, window_bounds = array<i64: 64, 1>}, {pipeline_mode = #tpu.pipeline_mode<synchronous>, transform_indices = @transform_3, window_bounds = array<i64: 96, 64>}, {pipeline_mode = #tpu.pipeline_mode<synchronous>, transform_indices = @transform_4, window_bounds = array<i64: 96, 1>}, {pipeline_mode = #tpu.pipeline_mode<synchronous>, transform_indices = @transform_5, window_bounds = array<i64: 120, 96>}, {pipeline_mode = #tpu.pipeline_mode<synchronous>, transform_indices = @transform_6, window_bounds = array<i64: 120, 1>}, {pipeline_mode = #tpu.pipeline_mode<synchronous>, transform_indices = @transform_7, window_bounds = array<i64: 128, 120>}, {pipeline_mode = #tpu.pipeline_mode<synchronous>, transform_indices = @transform_8, window_bounds = array<i64: 128, 1>}, {pipeline_mode = #tpu.pipeline_mode<synchronous>, transform_indices = @transform_9, window_bounds = array<i64: 32, 128>}, {pipeline_mode = #tpu.pipeline_mode<synchronous>, transform_indices = @transform_10, window_bounds = array<i64: 32, 1>}, {pipeline_mode = #tpu.pipeline_mode<synchronous>, transform_indices = @transform_11, window_bounds = array<i64: 32, 1>}, {pipeline_mode = #tpu.pipeline_mode<synchronous>, transform_indices = @transform_12, window_bounds = array<i64: 1, 1>}, {transform_indices = @transform_13, window_bounds = array<i64: 1, 128>}]} {
    %c0 = arith.constant 0 : index
    %c0_0 = arith.constant 0 : index
    %0 = vector.load %arg1[%c0, %c0_0] : memref<128x40xf32, #tpu.memory_space<vmem>>, vector<128x40xf32>
    %1 = arith.truncf %0 : vector<128x40xf32> to vector<128x40xbf16>
    %c0_1 = arith.constant 0 : index
    %c0_2 = arith.constant 0 : index
    %2 = vector.load %arg2[%c0_1, %c0_2] : memref<64x40xbf16, #tpu.memory_space<vmem>>, vector<64x40xbf16>
    %cst = arith.constant dense<0.000000e+00> : vector<64x128xf32>
    %3 = tpu.matmul %2, %1, %cst {dimension_numbers = #tpu.dot_dimension_numbers<[1], [1], [0], [0], [0, 0, 1, 0], [], []>} : vector<64x40xbf16>, vector<128x40xbf16>, vector<64x128xf32> -> vector<64x128xf32>
    %c0_3 = arith.constant 0 : index
    %c0_4 = arith.constant 0 : index
    %4 = vector.load %arg3[%c0_3, %c0_4] : memref<64x1xf32, #tpu.memory_space<vmem>>, vector<64x1xf32>
    %5 = vector.broadcast %4 : vector<64x1xf32> to vector<64x128xf32>
    %6 = arith.addf %3, %5 : vector<64x128xf32>
    %cst_5 = arith.constant 0.000000e+00 : f32
    %7 = vector.broadcast %cst_5 : f32 to vector<64x128xf32>
    %8 = arith.maximumf %6, %7 : vector<64x128xf32>
    %9 = arith.truncf %8 : vector<64x128xf32> to vector<64x128xbf16>
    %c0_6 = arith.constant 0 : index
    %c0_7 = arith.constant 0 : index
    %10 = vector.load %arg4[%c0_6, %c0_7] : memref<96x64xbf16, #tpu.memory_space<vmem>>, vector<96x64xbf16>
    %cst_8 = arith.constant dense<0.000000e+00> : vector<96x128xf32>
    %11 = tpu.matmul %10, %9, %cst_8 {dimension_numbers = #tpu.dot_dimension_numbers<[1], [0], [0], [1], [0, 0, 1, 1], [], []>} : vector<96x64xbf16>, vector<64x128xbf16>, vector<96x128xf32> -> vector<96x128xf32>
    %c0_9 = arith.constant 0 : index
    %c0_10 = arith.constant 0 : index
    %12 = vector.load %arg5[%c0_9, %c0_10] : memref<96x1xf32, #tpu.memory_space<vmem>>, vector<96x1xf32>
    %13 = vector.broadcast %12 : vector<96x1xf32> to vector<96x128xf32>
    %14 = arith.addf %11, %13 : vector<96x128xf32>
    %cst_11 = arith.constant 0.000000e+00 : f32
    %15 = vector.broadcast %cst_11 : f32 to vector<96x128xf32>
    %16 = arith.maximumf %14, %15 : vector<96x128xf32>
    %17 = arith.truncf %16 : vector<96x128xf32> to vector<96x128xbf16>
    %c0_12 = arith.constant 0 : index
    %c0_13 = arith.constant 0 : index
    %18 = vector.load %arg6[%c0_12, %c0_13] : memref<120x96xbf16, #tpu.memory_space<vmem>>, vector<120x96xbf16>
    %cst_14 = arith.constant dense<0.000000e+00> : vector<120x128xf32>
    %19 = tpu.matmul %18, %17, %cst_14 {dimension_numbers = #tpu.dot_dimension_numbers<[1], [0], [0], [1], [0, 0, 1, 1], [], []>} : vector<120x96xbf16>, vector<96x128xbf16>, vector<120x128xf32> -> vector<120x128xf32>
    %c0_15 = arith.constant 0 : index
    %c0_16 = arith.constant 0 : index
    %20 = vector.load %arg7[%c0_15, %c0_16] : memref<120x1xf32, #tpu.memory_space<vmem>>, vector<120x1xf32>
    %21 = vector.broadcast %20 : vector<120x1xf32> to vector<120x128xf32>
    %22 = arith.addf %19, %21 : vector<120x128xf32>
    %cst_17 = arith.constant 0.000000e+00 : f32
    %23 = vector.broadcast %cst_17 : f32 to vector<120x128xf32>
    %24 = arith.maximumf %22, %23 : vector<120x128xf32>
    %25 = arith.truncf %24 : vector<120x128xf32> to vector<120x128xbf16>
    %c0_18 = arith.constant 0 : index
    %c0_19 = arith.constant 0 : index
    %26 = vector.load %arg8[%c0_18, %c0_19] : memref<128x120xbf16, #tpu.memory_space<vmem>>, vector<128x120xbf16>
    %cst_20 = arith.constant dense<0.000000e+00> : vector<128x128xf32>
    %27 = tpu.matmul %26, %25, %cst_20 {dimension_numbers = #tpu.dot_dimension_numbers<[1], [0], [0], [1], [0, 0, 1, 1], [], []>} : vector<128x120xbf16>, vector<120x128xbf16>, vector<128x128xf32> -> vector<128x128xf32>
    %c0_21 = arith.constant 0 : index
    %c0_22 = arith.constant 0 : index
    %28 = vector.load %arg9[%c0_21, %c0_22] : memref<128x1xf32, #tpu.memory_space<vmem>>, vector<128x1xf32>
    %29 = vector.broadcast %28 : vector<128x1xf32> to vector<128x128xf32>
    %30 = arith.addf %27, %29 : vector<128x128xf32>
    %cst_23 = arith.constant 0.000000e+00 : f32
    %31 = vector.broadcast %cst_23 : f32 to vector<128x128xf32>
    %32 = arith.maximumf %30, %31 : vector<128x128xf32>
    %33 = arith.truncf %32 : vector<128x128xf32> to vector<128x128xbf16>
    %c0_24 = arith.constant 0 : index
    %c0_25 = arith.constant 0 : index
    %34 = vector.load %arg10[%c0_24, %c0_25] : memref<32x128xbf16, #tpu.memory_space<vmem>>, vector<32x128xbf16>
    %cst_26 = arith.constant dense<0.000000e+00> : vector<32x128xf32>
    %35 = tpu.matmul %34, %33, %cst_26 {dimension_numbers = #tpu.dot_dimension_numbers<[1], [0], [0], [1], [0, 0, 1, 1], [], []>} : vector<32x128xbf16>, vector<128x128xbf16>, vector<32x128xf32> -> vector<32x128xf32>
    %c0_27 = arith.constant 0 : index
    %c0_28 = arith.constant 0 : index
    %36 = vector.load %arg11[%c0_27, %c0_28] : memref<32x1xf32, #tpu.memory_space<vmem>>, vector<32x1xf32>
    %37 = vector.broadcast %36 : vector<32x1xf32> to vector<32x128xf32>
    %38 = arith.addf %35, %37 : vector<32x128xf32>
    %cst_29 = arith.constant 0.000000e+00 : f32
    %39 = vector.broadcast %cst_29 : f32 to vector<32x128xf32>
    %40 = arith.maximumf %38, %39 : vector<32x128xf32>
    %c0_30 = arith.constant 0 : index
    %c0_31 = arith.constant 0 : index
    %41 = vector.load %arg12[%c0_30, %c0_31] : memref<32x1xf32, #tpu.memory_space<vmem>>, vector<32x1xf32>
    %42 = vector.broadcast %41 : vector<32x1xf32> to vector<32x128xf32>
    %43 = arith.mulf %40, %42 : vector<32x128xf32>
    %cst_32 = arith.constant dense<0.000000e+00> : vector<128xf32>
    %44 = vector.multi_reduction <add>, %43, %cst_32 [0] : vector<32x128xf32> to vector<128xf32>
    %45 = vector.shape_cast %44 : vector<128xf32> to vector<1x128xf32>
    %c0_33 = arith.constant 0 : index
    %c0_34 = arith.constant 0 : index
    %46 = vector.load %arg13[%c0_33, %c0_34] : memref<1x1xf32, #tpu.memory_space<vmem>>, vector<1x1xf32>
    %47 = vector.broadcast %46 : vector<1x1xf32> to vector<1x128xf32>
    %48 = arith.addf %45, %47 : vector<1x128xf32>
    %c0_35 = arith.constant 0 : index
    %c0_36 = arith.constant 0 : index
    %49 = vector.load %arg14[%c0_35, %c0_36] : memref<1x128xf32, #tpu.memory_space<vmem>>, vector<1x128xf32>
    tpu.vector_store %arg14[%c0_35, %c0_36], %48 {strides = array<i32>} : memref<1x128xf32, #tpu.memory_space<vmem>>, vector<1x128xf32>,
    return
  }
  func.func @transform_0(%arg0: i32) -> (i32, i32) {
    %c0_i32 = arith.constant 0 : i32
    %c0_i32_0 = arith.constant 0 : i32
    return %arg0, %c0_i32 : i32, i32
  }
  func.func @transform_1(%arg0: i32) -> (i32, i32) {
    %c0_i32 = arith.constant 0 : i32
    %c0_i32_0 = arith.constant 0 : i32
    %c0_i32_1 = arith.constant 0 : i32
    return %c0_i32, %c0_i32_0 : i32, i32
  }
  func.func @transform_2(%arg0: i32) -> (i32, i32) {
    %c0_i32 = arith.constant 0 : i32
    %c0_i32_0 = arith.constant 0 : i32
    %c0_i32_1 = arith.constant 0 : i32
    return %c0_i32, %c0_i32_0 : i32, i32
  }
  func.func @transform_3(%arg0: i32) -> (i32, i32) {
    %c0_i32 = arith.constant 0 : i32
    %c0_i32_0 = arith.constant 0 : i32
    %c0_i32_1 = arith.constant 0 : i32
    return %c0_i32, %c0_i32_0 : i32, i32
  }
  func.func @transform_4(%arg0: i32) -> (i32, i32) {
    %c0_i32 = arith.constant 0 : i32
    %c0_i32_0 = arith.constant 0 : i32
    %c0_i32_1 = arith.constant 0 : i32
    return %c0_i32, %c0_i32_0 : i32, i32
  }
  func.func @transform_5(%arg0: i32) -> (i32, i32) {
    %c0_i32 = arith.constant 0 : i32
    %c0_i32_0 = arith.constant 0 : i32
    %c0_i32_1 = arith.constant 0 : i32
    return %c0_i32, %c0_i32_0 : i32, i32
  }
  func.func @transform_6(%arg0: i32) -> (i32, i32) {
    %c0_i32 = arith.constant 0 : i32
    %c0_i32_0 = arith.constant 0 : i32
    %c0_i32_1 = arith.constant 0 : i32
    return %c0_i32, %c0_i32_0 : i32, i32
  }
  func.func @transform_7(%arg0: i32) -> (i32, i32) {
    %c0_i32 = arith.constant 0 : i32
    %c0_i32_0 = arith.constant 0 : i32
    %c0_i32_1 = arith.constant 0 : i32
    return %c0_i32, %c0_i32_0 : i32, i32
  }
  func.func @transform_8(%arg0: i32) -> (i32, i32) {
    %c0_i32 = arith.constant 0 : i32
    %c0_i32_0 = arith.constant 0 : i32
    %c0_i32_1 = arith.constant 0 : i32
    return %c0_i32, %c0_i32_0 : i32, i32
  }
  func.func @transform_9(%arg0: i32) -> (i32, i32) {
    %c0_i32 = arith.constant 0 : i32
    %c0_i32_0 = arith.constant 0 : i32
    %c0_i32_1 = arith.constant 0 : i32
    return %c0_i32, %c0_i32_0 : i32, i32
  }
  func.func @transform_10(%arg0: i32) -> (i32, i32) {
    %c0_i32 = arith.constant 0 : i32
    %c0_i32_0 = arith.constant 0 : i32
    %c0_i32_1 = arith.constant 0 : i32
    return %c0_i32, %c0_i32_0 : i32, i32
  }
  func.func @transform_11(%arg0: i32) -> (i32, i32) {
    %c0_i32 = arith.constant 0 : i32
    %c0_i32_0 = arith.constant 0 : i32
    %c0_i32_1 = arith.constant 0 : i32
    return %c0_i32, %c0_i32_0 : i32, i32
  }
  func.func @transform_12(%arg0: i32) -> (i32, i32) {
    %c0_i32 = arith.constant 0 : i32
    %c0_i32_0 = arith.constant 0 : i32
    %c0_i32_1 = arith.constant 0 : i32
    return %c0_i32, %c0_i32_0 : i32, i32
  }
  func.func @transform_13(%arg0: i32) -> (i32, i32) {
    %c0_i32 = arith.constant 0 : i32
    %c0_i32_0 = arith.constant 0 : i32
    return %c0_i32, %arg0 : i32, i32
  }
}

</mosaic_0001>

<llo_original>
// kernel: cnn_forward_pallas.1
$region0: #{cnn_forward_pallas.1}
  #allocation0 [shape = 'u32[]', space=smem, size = 0x4, offset = 0x4, fixed_abs, tag = 'smem constant byte address 0x4 - core index']
  #allocation1 [shape = 'u32[72,128]{1,0:T(1,128)}', space=vmem, size = 0x9000, scoped, tag = 'internal scratch']
  #allocation2 [shape = 'f32[1,1]{1,0:T(1,128)S(1)}', space=vmem, size = 0x200, scoped, tag = 'scoped memory for cnn_forward_pallas.1']
  %s0 = inlined_call_operand.vmem [shape: f32[128,40], index: 0, kind: input, shape index: {}]
  %s1 = inlined_call_operand.vmem [shape: bf16[64,40], index: 1, kind: input, shape index: {}]
  %s2 = inlined_call_operand.vmem [shape: f32[64,1], index: 2, kind: input, shape index: {}]
  %s3 = inlined_call_operand.vmem [shape: bf16[96,64], index: 3, kind: input, shape index: {}]
  %s4 = inlined_call_operand.vmem [shape: f32[96,1], index: 4, kind: input, shape index: {}]
  %s5 = inlined_call_operand.vmem [shape: bf16[120,96], index: 5, kind: input, shape index: {}]
  %s6 = inlined_call_operand.vmem [shape: f32[120,1], index: 6, kind: input, shape index: {}]
  %s7 = inlined_call_operand.vmem [shape: bf16[128,120], index: 7, kind: input, shape index: {}]
  %s8 = inlined_call_operand.vmem [shape: f32[128,1], index: 8, kind: input, shape index: {}]
  %s9 = inlined_call_operand.vmem [shape: bf16[32,128], index: 9, kind: input, shape index: {}]
  %s10 = inlined_call_operand.vmem [shape: f32[32,1], index: 10, kind: input, shape index: {}]
  %s11 = inlined_call_operand.vmem [shape: f32[32,1], index: 11, kind: input, shape index: {}]
  %s12 = inlined_call_operand.<no memory space> [shape: f32[1,1], index: 12, kind: input, shape index: {}]
  %s13 = inlined_call_operand.vmem [shape: f32[1,128], index: 13, kind: output, shape index: {}]
  %s14 = sld [smem:[#allocation0]]
  $region62: #{cnn_forward_pallas.1} parent=0
    _
  %s16 = ssub.s32 1, %s14
  %s17 = scalar_select 0, %s16, %s14
  %v18 = vstv %s12
  %19 = vst [vmem:[#allocation2] sm:$0x1] %v18
  // Predicated region
  $region2: #{cnn_forward_pallas.1} parent=0 // pred_check
    _
  $region3: #{cnn_forward_pallas.1} parent=0 // pred_check_branch
    %21 = sbr.rel (0) target = $region5
  $region4: #{cnn_forward_pallas.1} parent=0 // pred_region
    _
  $region5: #{cnn_forward_pallas.1} parent=0 // pred_fallthru
    _
  // Predicated region
  $region6: #{cnn_forward_pallas.1} parent=0 // pred_check
    _
  $region7: #{cnn_forward_pallas.1} parent=0 // pred_check_branch
    %23 = sbr.rel (0) target = $region9
  $region8: #{cnn_forward_pallas.1} parent=0 // pred_region
    _
  $region9: #{cnn_forward_pallas.1} parent=0 // pred_fallthru
    _
  // Predicated region
  $region10: #{cnn_forward_pallas.1} parent=0 // pred_check
    _
  $region11: #{cnn_forward_pallas.1} parent=0 // pred_check_branch
    %25 = sbr.rel (0) target = $region13
  $region12: #{cnn_forward_pallas.1} parent=0 // pred_region
    _
  $region13: #{cnn_forward_pallas.1} parent=0 // pred_fallthru
    _
  // Predicated region
  $region14: #{cnn_forward_pallas.1} parent=0 // pred_check
    _
  $region15: #{cnn_forward_pallas.1} parent=0 // pred_check_branch
    %27 = sbr.rel (0) target = $region17
  $region16: #{cnn_forward_pallas.1} parent=0 // pred_region
    _
  $region17: #{cnn_forward_pallas.1} parent=0 // pred_fallthru
    _
  // Predicated region
  $region18: #{cnn_forward_pallas.1} parent=0 // pred_check
    _
  $region19: #{cnn_forward_pallas.1} parent=0 // pred_check_branch
    %29 = sbr.rel (0) target = $region21
  $region20: #{cnn_forward_pallas.1} parent=0 // pred_region
    _
  $region21: #{cnn_forward_pallas.1} parent=0 // pred_fallthru
    _
  // Predicated region
  $region22: #{cnn_forward_pallas.1} parent=0 // pred_check
    _
  $region23: #{cnn_forward_pallas.1} parent=0 // pred_check_branch
    %31 = sbr.rel (0) target = $region25
  $region24: #{cnn_forward_pallas.1} parent=0 // pred_region
    _
  $region25: #{cnn_forward_pallas.1} parent=0 // pred_fallthru
    _
  // Predicated region
  $region26: #{cnn_forward_pallas.1} parent=0 // pred_check
    _
  $region27: #{cnn_forward_pallas.1} parent=0 // pred_check_branch
    %33 = sbr.rel (0) target = $region29
  $region28: #{cnn_forward_pallas.1} parent=0 // pred_region
    _
  $region29: #{cnn_forward_pallas.1} parent=0 // pred_fallthru
    _
  // Predicated region
  $region30: #{cnn_forward_pallas.1} parent=0 // pred_check
    _
  $region31: #{cnn_forward_pallas.1} parent=0 // pred_check_branch
    %35 = sbr.rel (0) target = $region33
  $region32: #{cnn_forward_pallas.1} parent=0 // pred_region
    _
  $region33: #{cnn_forward_pallas.1} parent=0 // pred_fallthru
    _
  // Predicated region
  $region34: #{cnn_forward_pallas.1} parent=0 // pred_check
    _
  $region35: #{cnn_forward_pallas.1} parent=0 // pred_check_branch
    %37 = sbr.rel (0) target = $region37
  $region36: #{cnn_forward_pallas.1} parent=0 // pred_region
    _
  $region37: #{cnn_forward_pallas.1} parent=0 // pred_fallthru
    _
  // Predicated region
  $region38: #{cnn_forward_pallas.1} parent=0 // pred_check
    _
  $region39: #{cnn_forward_pallas.1} parent=0 // pred_check_branch
    %39 = sbr.rel (0) target = $region41
  $region40: #{cnn_forward_pallas.1} parent=0 // pred_region
    _
  $region41: #{cnn_forward_pallas.1} parent=0 // pred_fallthru
    _
  // Predicated region
  $region42: #{cnn_forward_pallas.1} parent=0 // pred_check
    _
  $region43: #{cnn_forward_pallas.1} parent=0 // pred_check_branch
    %41 = sbr.rel (0) target = $region45
  $region44: #{cnn_forward_pallas.1} parent=0 // pred_region
    _
  $region45: #{cnn_forward_pallas.1} parent=0 // pred_fallthru
    _
  // Predicated region
  $region46: #{cnn_forward_pallas.1} parent=0 // pred_check
    _
  $region47: #{cnn_forward_pallas.1} parent=0 // pred_check_branch
    %43 = sbr.rel (0) target = $region49
  $region48: #{cnn_forward_pallas.1} parent=0 // pred_region
    _
  $region49: #{cnn_forward_pallas.1} parent=0 // pred_fallthru
    _
  // Predicated region
  $region50: #{cnn_forward_pallas.1} parent=0 // pred_check
    _
  $region51: #{cnn_forward_pallas.1} parent=0 // pred_check_branch
    %45 = sbr.rel (0) target = $region53
  $region52: #{cnn_forward_pallas.1} parent=0 // pred_region
    _
  $region53: #{cnn_forward_pallas.1} parent=0 // pred_fallthru
    _
  %v47 = vld [vmem:[%s0] sm:$0xff]
  %v48 = vld [vmem:[%s0 + $0x8] sm:$0xff]
  %v49 = vld [vmem:[%s0 + $0x10] sm:$0xff]
  %v50 = vld [vmem:[%s0 + $0x18] sm:$0xff]
  %v51 = vld [vmem:[%s0 + $0x20] sm:$0xff]
  %v52 = vld [vmem:[%s0 + $0x28] sm:$0xff]
  %v53 = vld [vmem:[%s0 + $0x30] sm:$0xff]
  %v54 = vld [vmem:[%s0 + $0x38] sm:$0xff]
  %v55 = vld [vmem:[%s0 + $0x40] sm:$0xff]
  %v56 = vld [vmem:[%s0 + $0x48] sm:$0xff]
  %v57 = vld [vmem:[%s0 + $0x50] sm:$0xff]
  %v58 = vld [vmem:[%s0 + $0x58] sm:$0xff]
  %v59 = vld [vmem:[%s0 + $0x60] sm:$0xff]
  %v60 = vld [vmem:[%s0 + $0x68] sm:$0xff]
  %v61 = vld [vmem:[%s0 + $0x70] sm:$0xff]
  %v62 = vld [vmem:[%s0 + $0x78] sm:$0xff]
  %v63 = vpack.c.bf16 %v48, %v47
  %v64 = vpack.c.bf16 %v50, %v49
  %v65 = vpack.c.bf16 %v52, %v51
  %v66 = vpack.c.bf16 %v54, %v53
  %v67 = vpack.c.bf16 %v56, %v55
  %v68 = vpack.c.bf16 %v58, %v57
  %v69 = vpack.c.bf16 %v60, %v59
  %v70 = vpack.c.bf16 %v62, %v61
  %v71 = vld [vmem:[%s1] sm:$0xf]
  %v72 = vld [vmem:[%s1 + $0x4] sm:$0xf]
  %v73 = vld [vmem:[%s1 + $0x8] sm:$0xf]
  %v74 = vld [vmem:[%s1 + $0xc] sm:$0xf]
  %v75 = vld [vmem:[%s1 + $0x10] sm:$0xf]
  %v76 = vld [vmem:[%s1 + $0x14] sm:$0xf]
  %v77 = vld [vmem:[%s1 + $0x18] sm:$0xf]
  %v78 = vld [vmem:[%s1 + $0x1c] sm:$0xf]
  %v79 = vld [vmem:[%s2] sm:$0xff]
  %v80 = vld [vmem:[%s2 + $0x8] sm:$0xff]
  %v81 = vld [vmem:[%s2 + $0x10] sm:$0xff]
  %v82 = vld [vmem:[%s2 + $0x18] sm:$0xff]
  %v83 = vld [vmem:[%s2 + $0x20] sm:$0xff]
  %v84 = vld [vmem:[%s2 + $0x28] sm:$0xff]
  %v85 = vld [vmem:[%s2 + $0x30] sm:$0xff]
  %v86 = vld [vmem:[%s2 + $0x38] sm:$0xff]
  %88 = vset.pattern.permute.xlu0 0
  %89 = vperm.xlu0 %88, %v79
  %v90 = vpop.permute.xlu0 %89
  %93 = vset.pattern.permute.xlu0 0
  %94 = vperm.xlu0 %93, %v80
  %v95 = vpop.permute.xlu0 %94
  %98 = vset.pattern.permute.xlu0 0
  %99 = vperm.xlu0 %98, %v81
  %v100 = vpop.permute.xlu0 %99
  %103 = vset.pattern.permute.xlu0 0
  %104 = vperm.xlu0 %103, %v82
  %v105 = vpop.permute.xlu0 %104
  %108 = vset.pattern.permute.xlu0 0
  %109 = vperm.xlu0 %108, %v83
  %v110 = vpop.permute.xlu0 %109
  %113 = vset.pattern.permute.xlu0 0
  %114 = vperm.xlu0 %113, %v84
  %v115 = vpop.permute.xlu0 %114
  %118 = vset.pattern.permute.xlu0 0
  %119 = vperm.xlu0 %118, %v85
  %v120 = vpop.permute.xlu0 %119
  %123 = vset.pattern.permute.xlu0 0
  %124 = vperm.xlu0 %123, %v86
  %v125 = vpop.permute.xlu0 %124
  %v135 = vunpack.c.l.b16 %v71
  %v136 = vunpack.c.l.b16 %v72
  %v137 = vunpack.c.l.b16 %v73
  %v138 = vunpack.c.l.b16 %v74
  %v139 = vunpack.c.l.b16 %v75
  %v140 = vunpack.c.l.b16 %v76
  %v141 = vunpack.c.l.b16 %v77
  %v142 = vunpack.c.l.b16 %v78
  %v143 = vpack.c.b16 %v136, %v135
  %v144 = vpack.c.b16 %v138, %v137
  %v145 = vpack.c.b16 %v140, %v139
  %v146 = vpack.c.b16 %v142, %v141
  %vm147 = vcmask 326656
  %v149 = vsel %vm147, %v143, 0
  %v152 = vsel %vm147, %v144, 0
  %v155 = vsel %vm147, %v145, 0
  %v158 = vsel %vm147, %v146, 0
  %v161 = vsel %vm147, %v63, 0
  %v164 = vsel %vm147, %v64, 0
  %v167 = vsel %vm147, %v65, 0
  %v170 = vsel %vm147, %v66, 0
  %v173 = vsel %vm147, %v67, 0
  %v176 = vsel %vm147, %v68, 0
  %v179 = vsel %vm147, %v69, 0
  %v182 = vsel %vm147, %v70, 0
  %184 = vmatpush.bf16.xpose.msra.mxu0 %v182
  %185 = vmatpush.bf16.xpose.msra.mxu0 %v179
  %186 = vmatpush.bf16.xpose.msra.mxu0 %v176
  %187 = vmatpush.bf16.xpose.msra.mxu0 %v173
  %188 = vmatpush.bf16.xpose.msra.mxu0 %v170
  %189 = vmatpush.bf16.xpose.msra.mxu0 %v167
  %190 = vmatpush.bf16.xpose.msra.mxu0 %v164
  %191 = vmatpush.bf16.xpose.msra.mxu0 %v161
  %192 = vmatmul.bf16.gmra.mxu0 %v149
  %v193 = vpop.f32.mrf.mxu0
  %v194 = vadd.f32 %v90, %v193
  %v195 = vpop.f32.mrf.mxu0
  %v196 = vadd.f32 %v95, %v195
  %197 = vmatmul.bf16.gmra.mxu0 %v152
  %v198 = vpop.f32.mrf.mxu0
  %v199 = vadd.f32 %v100, %v198
  %v200 = vpop.f32.mrf.mxu0
  %v201 = vadd.f32 %v105, %v200
  %202 = vmatmul.bf16.gmra.mxu0 %v155
  %v203 = vpop.f32.mrf.mxu0
  %v204 = vadd.f32 %v110, %v203
  %v205 = vpop.f32.mrf.mxu0
  %v206 = vadd.f32 %v115, %v205
  %207 = vmatmul.bf16.gmra.mxu0 %v158
  %v208 = vpop.f32.mrf.mxu0
  %v209 = vadd.f32 %v120, %v208
  %v210 = vpop.f32.mrf.mxu0
  %v211 = vadd.f32 %v125, %v210
  %212 = vdwg.mxu0
  %v213 = vmax.f32 %v194, 0.0
  %v214 = vmax.f32 %v196, 0.0
  %v215 = vmax.f32 %v199, 0.0
  %v216 = vmax.f32 %v201, 0.0
  %v217 = vmax.f32 %v204, 0.0
  %v218 = vmax.f32 %v206, 0.0
  %v219 = vmax.f32 %v209, 0.0
  %v220 = vmax.f32 %v211, 0.0
  %v221 = vpack.c.bf16 %v214, %v213
  %v222 = vpack.c.bf16 %v216, %v215
  %v223 = vpack.c.bf16 %v218, %v217
  %v224 = vpack.c.bf16 %v220, %v219
  %v225 = vld [vmem:[%s3] sm:$0xf]
  %v226 = vld [vmem:[%s3 + $0x4] sm:$0xf]
  %v227 = vld [vmem:[%s3 + $0x8] sm:$0xf]
  %v228 = vld [vmem:[%s3 + $0xc] sm:$0xf]
  %v229 = vld [vmem:[%s3 + $0x10] sm:$0xf]
  %v230 = vld [vmem:[%s3 + $0x14] sm:$0xf]
  %v231 = vld [vmem:[%s3 + $0x18] sm:$0xf]
  %v232 = vld [vmem:[%s3 + $0x1c] sm:$0xf]
  %v233 = vld [vmem:[%s3 + $0x20] sm:$0xf]
  %v234 = vld [vmem:[%s3 + $0x24] sm:$0xf]
  %v235 = vld [vmem:[%s3 + $0x28] sm:$0xf]
  %v236 = vld [vmem:[%s3 + $0x2c] sm:$0xf]
  %v237 = vld [vmem:[%s4] sm:$0xff]
  %v238 = vld [vmem:[%s4 + $0x8] sm:$0xff]
  %v239 = vld [vmem:[%s4 + $0x10] sm:$0xff]
  %v240 = vld [vmem:[%s4 + $0x18] sm:$0xff]
  %v241 = vld [vmem:[%s4 + $0x20] sm:$0xff]
  %v242 = vld [vmem:[%s4 + $0x28] sm:$0xff]
  %v243 = vld [vmem:[%s4 + $0x30] sm:$0xff]
  %v244 = vld [vmem:[%s4 + $0x38] sm:$0xff]
  %v245 = vld [vmem:[%s4 + $0x40] sm:$0xff]
  %v246 = vld [vmem:[%s4 + $0x48] sm:$0xff]
  %v247 = vld [vmem:[%s4 + $0x50] sm:$0xff]
  %v248 = vld [vmem:[%s4 + $0x58] sm:$0xff]
  %250 = vset.pattern.permute.xlu0 0
  %251 = vperm.xlu0 %250, %v237
  %v252 = vpop.permute.xlu0 %251
  %255 = vset.pattern.permute.xlu0 0
  %256 = vperm.xlu0 %255, %v238
  %v257 = vpop.permute.xlu0 %256
  %260 = vset.pattern.permute.xlu0 0
  %261 = vperm.xlu0 %260, %v239
  %v262 = vpop.permute.xlu0 %261
  %265 = vset.pattern.permute.xlu0 0
  %266 = vperm.xlu0 %265, %v240
  %v267 = vpop.permute.xlu0 %266
  %270 = vset.pattern.permute.xlu0 0
  %271 = vperm.xlu0 %270, %v241
  %v272 = vpop.permute.xlu0 %271
  %275 = vset.pattern.permute.xlu0 0
  %276 = vperm.xlu0 %275, %v242
  %v277 = vpop.permute.xlu0 %276
  %280 = vset.pattern.permute.xlu0 0
  %281 = vperm.xlu0 %280, %v243
  %v282 = vpop.permute.xlu0 %281
  %285 = vset.pattern.permute.xlu0 0
  %286 = vperm.xlu0 %285, %v244
  %v287 = vpop.permute.xlu0 %286
  %290 = vset.pattern.permute.xlu0 0
  %291 = vperm.xlu0 %290, %v245
  %v292 = vpop.permute.xlu0 %291
  %295 = vset.pattern.permute.xlu0 0
  %296 = vperm.xlu0 %295, %v246
  %v297 = vpop.permute.xlu0 %296
  %300 = vset.pattern.permute.xlu0 0
  %301 = vperm.xlu0 %300, %v247
  %v302 = vpop.permute.xlu0 %301
  %305 = vset.pattern.permute.xlu0 0
  %306 = vperm.xlu0 %305, %v248
  %v307 = vpop.permute.xlu0 %306
  %v321 = vunpack.c.l.b16 %v225
  %v322 = vunpack.c.l.b16 %v226
  %v323 = vunpack.c.l.b16 %v227
  %v324 = vunpack.c.l.b16 %v228
  %v325 = vunpack.c.l.b16 %v229
  %v326 = vunpack.c.l.b16 %v230
  %v327 = vunpack.c.l.b16 %v231
  %v328 = vunpack.c.l.b16 %v232
  %v329 = vunpack.c.l.b16 %v233
  %v330 = vunpack.c.l.b16 %v234
  %v331 = vunpack.c.l.b16 %v235
  %v332 = vunpack.c.l.b16 %v236
  %v333 = vpack.c.b16 %v322, %v321
  %v334 = vpack.c.b16 %v324, %v323
  %v335 = vpack.c.b16 %v326, %v325
  %v336 = vpack.c.b16 %v328, %v327
  %v337 = vpack.c.b16 %v330, %v329
  %v338 = vpack.c.b16 %v332, %v331
  %vm339 = vcmask 523264
  %v341 = vsel %vm339, %v333, 0
  %v344 = vsel %vm339, %v334, 0
  %v347 = vsel %vm339, %v335, 0
  %v350 = vsel %vm339, %v336, 0
  %v353 = vsel %vm339, %v337, 0
  %v356 = vsel %vm339, %v338, 0
  %358 = vmatpush.bf16.msra.mxu0 0
  %359 = vmatpush.bf16.msra.mxu0 0
  %360 = vmatpush.bf16.msra.mxu0 0
  %361 = vmatpush.bf16.msra.mxu0 0
  %362 = vmatpush.bf16.msra.mxu0 %v224
  %363 = vmatpush.bf16.msra.mxu0 %v223
  %364 = vmatpush.bf16.msra.mxu0 %v222
  %365 = vmatpush.bf16.msra.mxu0 %v221
  %366 = vmatmul.bf16.gmra.mxu0 %v341
  %v367 = vpop.f32.mrf.mxu0
  %v368 = vadd.f32 %v252, %v367
  %v369 = vpop.f32.mrf.mxu0
  %v370 = vadd.f32 %v257, %v369
  %371 = vmatmul.bf16.gmra.mxu0 %v344
  %v372 = vpop.f32.mrf.mxu0
  %v373 = vadd.f32 %v262, %v372
  %v374 = vpop.f32.mrf.mxu0
  %v375 = vadd.f32 %v267, %v374
  %376 = vmatmul.bf16.gmra.mxu0 %v347
  %v377 = vpop.f32.mrf.mxu0
  %v378 = vadd.f32 %v272, %v377
  %v379 = vpop.f32.mrf.mxu0
  %v380 = vadd.f32 %v277, %v379
  %381 = vmatmul.bf16.gmra.mxu0 %v350
  %v382 = vpop.f32.mrf.mxu0
  %v383 = vadd.f32 %v282, %v382
  %v384 = vpop.f32.mrf.mxu0
  %v385 = vadd.f32 %v287, %v384
  %386 = vmatmul.bf16.gmra.mxu0 %v353
  %v387 = vpop.f32.mrf.mxu0
  %v388 = vadd.f32 %v292, %v387
  %v389 = vpop.f32.mrf.mxu0
  %v390 = vadd.f32 %v297, %v389
  %391 = vmatmul.bf16.gmra.mxu0 %v356
  %v392 = vpop.f32.mrf.mxu0
  %v393 = vadd.f32 %v302, %v392
  %v394 = vpop.f32.mrf.mxu0
  %v395 = vadd.f32 %v307, %v394
  %396 = vdwg.mxu0
  %v397 = vmax.f32 %v368, 0.0
  %v398 = vmax.f32 %v370, 0.0
  %v399 = vmax.f32 %v373, 0.0
  %v400 = vmax.f32 %v375, 0.0
  %v401 = vmax.f32 %v378, 0.0
  %v402 = vmax.f32 %v380, 0.0
  %v403 = vmax.f32 %v383, 0.0
  %v404 = vmax.f32 %v385, 0.0
  %v405 = vmax.f32 %v388, 0.0
  %v406 = vmax.f32 %v390, 0.0
  %v407 = vmax.f32 %v393, 0.0
  %v408 = vmax.f32 %v395, 0.0
  %v409 = vpack.c.bf16 %v398, %v397
  %v410 = vpack.c.bf16 %v400, %v399
  %v411 = vpack.c.bf16 %v402, %v401
  %v412 = vpack.c.bf16 %v404, %v403
  %v413 = vpack.c.bf16 %v406, %v405
  %v414 = vpack.c.bf16 %v408, %v407
  %v415 = vld [vmem:[%s5] sm:$0xf]
  %v416 = vld [vmem:[%s5 + $0x4] sm:$0xf]
  %v417 = vld [vmem:[%s5 + $0x8] sm:$0xf]
  %v418 = vld [vmem:[%s5 + $0xc] sm:$0xf]
  %v419 = vld [vmem:[%s5 + $0x10] sm:$0xf]
  %v420 = vld [vmem:[%s5 + $0x14] sm:$0xf]
  %v421 = vld [vmem:[%s5 + $0x18] sm:$0xf]
  %v422 = vld [vmem:[%s5 + $0x1c] sm:$0xf]
  %v423 = vld [vmem:[%s5 + $0x20] sm:$0xf]
  %v424 = vld [vmem:[%s5 + $0x24] sm:$0xf]
  %v425 = vld [vmem:[%s5 + $0x28] sm:$0xf]
  %v426 = vld [vmem:[%s5 + $0x2c] sm:$0xf]
  %v427 = vld [vmem:[%s5 + $0x30] sm:$0xf]
  %v428 = vld [vmem:[%s5 + $0x34] sm:$0xf]
  %v429 = vld [vmem:[%s5 + $0x38] sm:$0xf]
  %v430 = vld [vmem:[%s6] sm:$0xff]
  %v431 = vld [vmem:[%s6 + $0x8] sm:$0xff]
  %v432 = vld [vmem:[%s6 + $0x10] sm:$0xff]
  %v433 = vld [vmem:[%s6 + $0x18] sm:$0xff]
  %v434 = vld [vmem:[%s6 + $0x20] sm:$0xff]
  %v435 = vld [vmem:[%s6 + $0x28] sm:$0xff]
  %v436 = vld [vmem:[%s6 + $0x30] sm:$0xff]
  %v437 = vld [vmem:[%s6 + $0x38] sm:$0xff]
  %v438 = vld [vmem:[%s6 + $0x40] sm:$0xff]
  %v439 = vld [vmem:[%s6 + $0x48] sm:$0xff]
  %v440 = vld [vmem:[%s6 + $0x50] sm:$0xff]
  %v441 = vld [vmem:[%s6 + $0x58] sm:$0xff]
  %v442 = vld [vmem:[%s6 + $0x60] sm:$0xff]
  %v443 = vld [vmem:[%s6 + $0x68] sm:$0xff]
  %v444 = vld [vmem:[%s6 + $0x70] sm:$0xff]
  %446 = vset.pattern.permute.xlu0 0
  %447 = vperm.xlu0 %446, %v430
  %v448 = vpop.permute.xlu0 %447
  %451 = vset.pattern.permute.xlu0 0
  %452 = vperm.xlu0 %451, %v431
  %v453 = vpop.permute.xlu0 %452
  %456 = vset.pattern.permute.xlu0 0
  %457 = vperm.xlu0 %456, %v432
  %v458 = vpop.permute.xlu0 %457
  %461 = vset.pattern.permute.xlu0 0
  %462 = vperm.xlu0 %461, %v433
  %v463 = vpop.permute.xlu0 %462
  %466 = vset.pattern.permute.xlu0 0
  %467 = vperm.xlu0 %466, %v434
  %v468 = vpop.permute.xlu0 %467
  %471 = vset.pattern.permute.xlu0 0
  %472 = vperm.xlu0 %471, %v435
  %v473 = vpop.permute.xlu0 %472
  %476 = vset.pattern.permute.xlu0 0
  %477 = vperm.xlu0 %476, %v436
  %v478 = vpop.permute.xlu0 %477
  %481 = vset.pattern.permute.xlu0 0
  %482 = vperm.xlu0 %481, %v437
  %v483 = vpop.permute.xlu0 %482
  %486 = vset.pattern.permute.xlu0 0
  %487 = vperm.xlu0 %486, %v438
  %v488 = vpop.permute.xlu0 %487
  %491 = vset.pattern.permute.xlu0 0
  %492 = vperm.xlu0 %491, %v439
  %v493 = vpop.permute.xlu0 %492
  %496 = vset.pattern.permute.xlu0 0
  %497 = vperm.xlu0 %496, %v440
  %v498 = vpop.permute.xlu0 %497
  %501 = vset.pattern.permute.xlu0 0
  %502 = vperm.xlu0 %501, %v441
  %v503 = vpop.permute.xlu0 %502
  %506 = vset.pattern.permute.xlu0 0
  %507 = vperm.xlu0 %506, %v442
  %v508 = vpop.permute.xlu0 %507
  %511 = vset.pattern.permute.xlu0 0
  %512 = vperm.xlu0 %511, %v443
  %v513 = vpop.permute.xlu0 %512
  %516 = vset.pattern.permute.xlu0 0
  %517 = vperm.xlu0 %516, %v444
  %v518 = vpop.permute.xlu0 %517
  %v535 = vunpack.c.l.b16 %v415
  %v536 = vunpack.c.l.b16 %v416
  %v537 = vunpack.c.l.b16 %v417
  %v538 = vunpack.c.l.b16 %v418
  %v539 = vunpack.c.l.b16 %v419
  %v540 = vunpack.c.l.b16 %v420
  %v541 = vunpack.c.l.b16 %v421
  %v542 = vunpack.c.l.b16 %v422
  %v543 = vunpack.c.l.b16 %v423
  %v544 = vunpack.c.l.b16 %v424
  %v545 = vunpack.c.l.b16 %v425
  %v546 = vunpack.c.l.b16 %v426
  %v547 = vunpack.c.l.b16 %v427
  %v548 = vunpack.c.l.b16 %v428
  %v549 = vunpack.c.l.b16 %v429
  %v550 = vpack.c.b16 %v536, %v535
  %v551 = vpack.c.b16 %v538, %v537
  %v552 = vpack.c.b16 %v540, %v539
  %v553 = vpack.c.b16 %v542, %v541
  %v554 = vpack.c.b16 %v544, %v543
  %v555 = vpack.c.b16 %v546, %v545
  %v556 = vpack.c.b16 %v548, %v547
  %v557 = vpack.c.b16 %v549, %v549
  %vm558 = vcmask 785408
  %v560 = vsel %vm558, %v550, 0
  %v563 = vsel %vm558, %v551, 0
  %v566 = vsel %vm558, %v552, 0
  %v569 = vsel %vm558, %v553, 0
  %v572 = vsel %vm558, %v554, 0
  %v575 = vsel %vm558, %v555, 0
  %v578 = vsel %vm558, %v556, 0
  %v581 = vsel %vm558, %v557, 0
  %583 = vmatpush.bf16.msra.mxu0 0
  %584 = vmatpush.bf16.msra.mxu0 0
  %585 = vmatpush.bf16.msra.mxu0 %v414
  %586 = vmatpush.bf16.msra.mxu0 %v413
  %587 = vmatpush.bf16.msra.mxu0 %v412
  %588 = vmatpush.bf16.msra.mxu0 %v411
  %589 = vmatpush.bf16.msra.mxu0 %v410
  %590 = vmatpush.bf16.msra.mxu0 %v409
  %591 = vmatmul.bf16.gmra.mxu0 %v560
  %v592 = vpop.f32.mrf.mxu0
  %v593 = vadd.f32 %v448, %v592
  %v594 = vpop.f32.mrf.mxu0
  %v595 = vadd.f32 %v453, %v594
  %596 = vmatmul.bf16.gmra.mxu0 %v563
  %v597 = vpop.f32.mrf.mxu0
  %v598 = vadd.f32 %v458, %v597
  %v599 = vpop.f32.mrf.mxu0
  %v600 = vadd.f32 %v463, %v599
  %601 = vmatmul.bf16.gmra.mxu0 %v566
  %v602 = vpop.f32.mrf.mxu0
  %v603 = vadd.f32 %v468, %v602
  %v604 = vpop.f32.mrf.mxu0
  %v605 = vadd.f32 %v473, %v604
  %606 = vmatmul.bf16.gmra.mxu0 %v569
  %v607 = vpop.f32.mrf.mxu0
  %v608 = vadd.f32 %v478, %v607
  %v609 = vpop.f32.mrf.mxu0
  %v610 = vadd.f32 %v483, %v609
  %611 = vmatmul.bf16.gmra.mxu0 %v572
  %v612 = vpop.f32.mrf.mxu0
  %v613 = vadd.f32 %v488, %v612
  %v614 = vpop.f32.mrf.mxu0
  %v615 = vadd.f32 %v493, %v614
  %616 = vmatmul.bf16.gmra.mxu0 %v575
  %v617 = vpop.f32.mrf.mxu0
  %v618 = vadd.f32 %v498, %v617
  %v619 = vpop.f32.mrf.mxu0
  %v620 = vadd.f32 %v503, %v619
  %621 = vmatmul.bf16.gmra.mxu0 %v578
  %v622 = vpop.f32.mrf.mxu0
  %v623 = vadd.f32 %v508, %v622
  %v624 = vpop.f32.mrf.mxu0
  %v625 = vadd.f32 %v513, %v624
  %626 = vmatmul.bf16.gmra.mxu0 %v581
  %v627 = vpop.f32.mrf.mxu0
  %v628 = vadd.f32 %v518, %v627
  %v629 = vpop.f32.mrf.mxu0
  %630 = vdwg.mxu0
  %v631 = vmax.f32 %v593, 0.0
  %v632 = vmax.f32 %v595, 0.0
  %v633 = vmax.f32 %v598, 0.0
  %v634 = vmax.f32 %v600, 0.0
  %v635 = vmax.f32 %v603, 0.0
  %v636 = vmax.f32 %v605, 0.0
  %v637 = vmax.f32 %v608, 0.0
  %v638 = vmax.f32 %v610, 0.0
  %v639 = vmax.f32 %v613, 0.0
  %v640 = vmax.f32 %v615, 0.0
  %v641 = vmax.f32 %v618, 0.0
  %v642 = vmax.f32 %v620, 0.0
  %v643 = vmax.f32 %v623, 0.0
  %v644 = vmax.f32 %v625, 0.0
  %v645 = vmax.f32 %v628, 0.0
  %v646 = vpack.c.bf16 %v632, %v631
  %v647 = vpack.c.bf16 %v634, %v633
  %v648 = vpack.c.bf16 %v636, %v635
  %v649 = vpack.c.bf16 %v638, %v637
  %v650 = vpack.c.bf16 %v640, %v639
  %v651 = vpack.c.bf16 %v642, %v641
  %v652 = vpack.c.bf16 %v644, %v643
  %v653 = vpack.c.bf16 %v645, %v645
  %v654 = vld [vmem:[%s7] sm:$0xf]
  %v655 = vld [vmem:[%s7 + $0x4] sm:$0xf]
  %v656 = vld [vmem:[%s7 + $0x8] sm:$0xf]
  %v657 = vld [vmem:[%s7 + $0xc] sm:$0xf]
  %v658 = vld [vmem:[%s7 + $0x10] sm:$0xf]
  %v659 = vld [vmem:[%s7 + $0x14] sm:$0xf]
  %v660 = vld [vmem:[%s7 + $0x18] sm:$0xf]
  %v661 = vld [vmem:[%s7 + $0x1c] sm:$0xf]
  %v662 = vld [vmem:[%s7 + $0x20] sm:$0xf]
  %v663 = vld [vmem:[%s7 + $0x24] sm:$0xf]
  %v664 = vld [vmem:[%s7 + $0x28] sm:$0xf]
  %v665 = vld [vmem:[%s7 + $0x2c] sm:$0xf]
  %v666 = vld [vmem:[%s7 + $0x30] sm:$0xf]
  %v667 = vld [vmem:[%s7 + $0x34] sm:$0xf]
  %v668 = vld [vmem:[%s7 + $0x38] sm:$0xf]
  %v669 = vld [vmem:[%s7 + $0x3c] sm:$0xf]
  %v670 = vld [vmem:[%s8] sm:$0xff]
  %v671 = vld [vmem:[%s8 + $0x8] sm:$0xff]
  %v672 = vld [vmem:[%s8 + $0x10] sm:$0xff]
  %v673 = vld [vmem:[%s8 + $0x18] sm:$0xff]
  %v674 = vld [vmem:[%s8 + $0x20] sm:$0xff]
  %v675 = vld [vmem:[%s8 + $0x28] sm:$0xff]
  %v676 = vld [vmem:[%s8 + $0x30] sm:$0xff]
  %v677 = vld [vmem:[%s8 + $0x38] sm:$0xff]
  %v678 = vld [vmem:[%s8 + $0x40] sm:$0xff]
  %v679 = vld [vmem:[%s8 + $0x48] sm:$0xff]
  %v680 = vld [vmem:[%s8 + $0x50] sm:$0xff]
  %v681 = vld [vmem:[%s8 + $0x58] sm:$0xff]
  %v682 = vld [vmem:[%s8 + $0x60] sm:$0xff]
  %v683 = vld [vmem:[%s8 + $0x68] sm:$0xff]
  %v684 = vld [vmem:[%s8 + $0x70] sm:$0xff]
  %v685 = vld [vmem:[%s8 + $0x78] sm:$0xff]
  %687 = vset.pattern.permute.xlu0 0
  %688 = vperm.xlu0 %687, %v670
  %v689 = vpop.permute.xlu0 %688
  %692 = vset.pattern.permute.xlu0 0
  %693 = vperm.xlu0 %692, %v671
  %v694 = vpop.permute.xlu0 %693
  %697 = vset.pattern.permute.xlu0 0
  %698 = vperm.xlu0 %697, %v672
  %v699 = vpop.permute.xlu0 %698
  %702 = vset.pattern.permute.xlu0 0
  %703 = vperm.xlu0 %702, %v673
  %v704 = vpop.permute.xlu0 %703
  %707 = vset.pattern.permute.xlu0 0
  %708 = vperm.xlu0 %707, %v674
  %v709 = vpop.permute.xlu0 %708
  %712 = vset.pattern.permute.xlu0 0
  %713 = vperm.xlu0 %712, %v675
  %v714 = vpop.permute.xlu0 %713
  %717 = vset.pattern.permute.xlu0 0
  %718 = vperm.xlu0 %717, %v676
  %v719 = vpop.permute.xlu0 %718
  %722 = vset.pattern.permute.xlu0 0
  %723 = vperm.xlu0 %722, %v677
  %v724 = vpop.permute.xlu0 %723
  %727 = vset.pattern.permute.xlu0 0
  %728 = vperm.xlu0 %727, %v678
  %v729 = vpop.permute.xlu0 %728
  %732 = vset.pattern.permute.xlu0 0
  %733 = vperm.xlu0 %732, %v679
  %v734 = vpop.permute.xlu0 %733
  %737 = vset.pattern.permute.xlu0 0
  %738 = vperm.xlu0 %737, %v680
  %v739 = vpop.permute.xlu0 %738
  %742 = vset.pattern.permute.xlu0 0
  %743 = vperm.xlu0 %742, %v681
  %v744 = vpop.permute.xlu0 %743
  %747 = vset.pattern.permute.xlu0 0
  %748 = vperm.xlu0 %747, %v682
  %v749 = vpop.permute.xlu0 %748
  %752 = vset.pattern.permute.xlu0 0
  %753 = vperm.xlu0 %752, %v683
  %v754 = vpop.permute.xlu0 %753
  %757 = vset.pattern.permute.xlu0 0
  %758 = vperm.xlu0 %757, %v684
  %v759 = vpop.permute.xlu0 %758
  %762 = vset.pattern.permute.xlu0 0
  %763 = vperm.xlu0 %762, %v685
  %v764 = vpop.permute.xlu0 %763
  %v782 = vunpack.c.l.b16 %v654
  %v783 = vunpack.c.l.b16 %v655
  %v784 = vunpack.c.l.b16 %v656
  %v785 = vunpack.c.l.b16 %v657
  %v786 = vunpack.c.l.b16 %v658
  %v787 = vunpack.c.l.b16 %v659
  %v788 = vunpack.c.l.b16 %v660
  %v789 = vunpack.c.l.b16 %v661
  %v790 = vunpack.c.l.b16 %v662
  %v791 = vunpack.c.l.b16 %v663
  %v792 = vunpack.c.l.b16 %v664
  %v793 = vunpack.c.l.b16 %v665
  %v794 = vunpack.c.l.b16 %v666
  %v795 = vunpack.c.l.b16 %v667
  %v796 = vunpack.c.l.b16 %v668
  %v797 = vunpack.c.l.b16 %v669
  %v798 = vpack.c.b16 %v783, %v782
  %v799 = vpack.c.b16 %v785, %v784
  %v800 = vpack.c.b16 %v787, %v786
  %v801 = vpack.c.b16 %v789, %v788
  %v802 = vpack.c.b16 %v791, %v790
  %v803 = vpack.c.b16 %v793, %v792
  %v804 = vpack.c.b16 %v795, %v794
  %v805 = vpack.c.b16 %v797, %v796
  %vm806 = vcmask 982016
  %v808 = vsel %vm806, %v798, 0
  %v811 = vsel %vm806, %v799, 0
  %v814 = vsel %vm806, %v800, 0
  %v817 = vsel %vm806, %v801, 0
  %v820 = vsel %vm806, %v802, 0
  %v823 = vsel %vm806, %v803, 0
  %v826 = vsel %vm806, %v804, 0
  %v829 = vsel %vm806, %v805, 0
  %vm831 = vcmask 1043456
  %v833 = vsel %vm831, %v653, 0
  %835 = vmatpush.bf16.msra.mxu0 %v833
  %836 = vmatpush.bf16.msra.mxu0 %v652
  %837 = vmatpush.bf16.msra.mxu0 %v651
  %838 = vmatpush.bf16.msra.mxu0 %v650
  %839 = vmatpush.bf16.msra.mxu0 %v649
  %840 = vmatpush.bf16.msra.mxu0 %v648
  %841 = vmatpush.bf16.msra.mxu0 %v647
  %842 = vmatpush.bf16.msra.mxu0 %v646
  %843 = vmatmul.bf16.gmra.mxu0 %v808
  %v844 = vpop.f32.mrf.mxu0
  %v845 = vadd.f32 %v689, %v844
  %v846 = vpop.f32.mrf.mxu0
  %v847 = vadd.f32 %v694, %v846
  %848 = vmatmul.bf16.gmra.mxu0 %v811
  %v849 = vpop.f32.mrf.mxu0
  %v850 = vadd.f32 %v699, %v849
  %v851 = vpop.f32.mrf.mxu0
  %v852 = vadd.f32 %v704, %v851
  %853 = vmatmul.bf16.gmra.mxu0 %v814
  %v854 = vpop.f32.mrf.mxu0
  %v855 = vadd.f32 %v709, %v854
  %v856 = vpop.f32.mrf.mxu0
  %v857 = vadd.f32 %v714, %v856
  %858 = vmatmul.bf16.gmra.mxu0 %v817
  %v859 = vpop.f32.mrf.mxu0
  %v860 = vadd.f32 %v719, %v859
  %v861 = vpop.f32.mrf.mxu0
  %v862 = vadd.f32 %v724, %v861
  %863 = vmatmul.bf16.gmra.mxu0 %v820
  %v864 = vpop.f32.mrf.mxu0
  %v865 = vadd.f32 %v729, %v864
  %v866 = vpop.f32.mrf.mxu0
  %v867 = vadd.f32 %v734, %v866
  %868 = vmatmul.bf16.gmra.mxu0 %v823
  %v869 = vpop.f32.mrf.mxu0
  %v870 = vadd.f32 %v739, %v869
  %v871 = vpop.f32.mrf.mxu0
  %v872 = vadd.f32 %v744, %v871
  %873 = vmatmul.bf16.gmra.mxu0 %v826
  %v874 = vpop.f32.mrf.mxu0
  %v875 = vadd.f32 %v749, %v874
  %v876 = vpop.f32.mrf.mxu0
  %v877 = vadd.f32 %v754, %v876
  %878 = vmatmul.bf16.gmra.mxu0 %v829
  %v879 = vpop.f32.mrf.mxu0
  %v880 = vadd.f32 %v759, %v879
  %v881 = vpop.f32.mrf.mxu0
  %v882 = vadd.f32 %v764, %v881
  %883 = vdwg.mxu0
  %v884 = vmax.f32 %v845, 0.0
  %v885 = vmax.f32 %v847, 0.0
  %v886 = vmax.f32 %v850, 0.0
  %v887 = vmax.f32 %v852, 0.0
  %v888 = vmax.f32 %v855, 0.0
  %v889 = vmax.f32 %v857, 0.0
  %v890 = vmax.f32 %v860, 0.0
  %v891 = vmax.f32 %v862, 0.0
  %v892 = vmax.f32 %v865, 0.0
  %v893 = vmax.f32 %v867, 0.0
  %v894 = vmax.f32 %v870, 0.0
  %v895 = vmax.f32 %v872, 0.0
  %v896 = vmax.f32 %v875, 0.0
  %v897 = vmax.f32 %v877, 0.0
  %v898 = vmax.f32 %v880, 0.0
  %v899 = vmax.f32 %v882, 0.0
  %v900 = vpack.c.bf16 %v885, %v884
  %v901 = vpack.c.bf16 %v887, %v886
  %v902 = vpack.c.bf16 %v889, %v888
  %v903 = vpack.c.bf16 %v891, %v890
  %v904 = vpack.c.bf16 %v893, %v892
  %v905 = vpack.c.bf16 %v895, %v894
  %v906 = vpack.c.bf16 %v897, %v896
  %v907 = vpack.c.bf16 %v899, %v898
  %v908 = vld [vmem:[%s9] sm:$0xf]
  %v909 = vld [vmem:[%s9 + $0x4] sm:$0xf]
  %v910 = vld [vmem:[%s9 + $0x8] sm:$0xf]
  %v911 = vld [vmem:[%s9 + $0xc] sm:$0xf]
  %v912 = vld [vmem:[%s10] sm:$0xff]
  %v913 = vld [vmem:[%s10 + $0x8] sm:$0xff]
  %v914 = vld [vmem:[%s10 + $0x10] sm:$0xff]
  %v915 = vld [vmem:[%s10 + $0x18] sm:$0xff]
  %917 = vset.pattern.permute.xlu0 0
  %918 = vperm.xlu0 %917, %v912
  %v919 = vpop.permute.xlu0 %918
  %922 = vset.pattern.permute.xlu0 0
  %923 = vperm.xlu0 %922, %v913
  %v924 = vpop.permute.xlu0 %923
  %927 = vset.pattern.permute.xlu0 0
  %928 = vperm.xlu0 %927, %v914
  %v929 = vpop.permute.xlu0 %928
  %932 = vset.pattern.permute.xlu0 0
  %933 = vperm.xlu0 %932, %v915
  %v934 = vpop.permute.xlu0 %933
  %v940 = vunpack.c.l.b16 %v908
  %v941 = vunpack.c.l.b16 %v909
  %v942 = vunpack.c.l.b16 %v910
  %v943 = vunpack.c.l.b16 %v911
  %v944 = vpack.c.b16 %v941, %v940
  %v945 = vpack.c.b16 %v943, %v942
  %948 = vmatpush.bf16.msra.mxu0 %v907
  %949 = vmatpush.bf16.msra.mxu0 %v906
  %950 = vmatpush.bf16.msra.mxu0 %v905
  %951 = vmatpush.bf16.msra.mxu0 %v904
  %952 = vmatpush.bf16.msra.mxu0 %v903
  %953 = vmatpush.bf16.msra.mxu0 %v902
  %954 = vmatpush.bf16.msra.mxu0 %v901
  %955 = vmatpush.bf16.msra.mxu0 %v900
  %956 = vmatmul.bf16.gmra.mxu0 %v944
  %v957 = vpop.f32.mrf.mxu0
  %v958 = vadd.f32 %v919, %v957
  %v959 = vpop.f32.mrf.mxu0
  %v960 = vadd.f32 %v924, %v959
  %961 = vmatmul.bf16.gmra.mxu0 %v945
  %v962 = vpop.f32.mrf.mxu0
  %v963 = vadd.f32 %v929, %v962
  %v964 = vpop.f32.mrf.mxu0
  %v965 = vadd.f32 %v934, %v964
  %966 = vdwg.mxu0
  %v967 = vmax.f32 %v958, 0.0
  %v968 = vmax.f32 %v960, 0.0
  %v969 = vmax.f32 %v963, 0.0
  %v970 = vmax.f32 %v965, 0.0
  %v971 = vld [vmem:[%s11] sm:$0xff]
  %v972 = vld [vmem:[%s11 + $0x8] sm:$0xff]
  %v973 = vld [vmem:[%s11 + $0x10] sm:$0xff]
  %v974 = vld [vmem:[%s11 + $0x18] sm:$0xff]
  %976 = vset.pattern.permute.xlu0 0
  %977 = vperm.xlu0 %976, %v971
  %v978 = vpop.permute.xlu0 %977
  %981 = vset.pattern.permute.xlu0 0
  %982 = vperm.xlu0 %981, %v972
  %v983 = vpop.permute.xlu0 %982
  %986 = vset.pattern.permute.xlu0 0
  %987 = vperm.xlu0 %986, %v973
  %v988 = vpop.permute.xlu0 %987
  %991 = vset.pattern.permute.xlu0 0
  %992 = vperm.xlu0 %991, %v974
  %v993 = vpop.permute.xlu0 %992
  %v995 = vmul.f32 %v967, %v978
  %v996 = vmul.f32 %v968, %v983
  %v997 = vmul.f32 %v969, %v988
  %v998 = vmul.f32 %v970, %v993
  %v999 = vadd.f32 %v995, %v996
  %v1000 = vadd.f32 %v999, %v997
  %v1001 = vadd.f32 %v1000, %v998
  %v1002 = vrot.slane %v1001, 4
  %v1003 = vadd.f32 %v1001, %v1002
  %v1004 = vrot.slane %v1003, 2
  %v1005 = vadd.f32 %v1003, %v1004
  %v1006 = vrot.slane %v1005, 1
  %v1007 = vadd.f32 %v1005, %v1006
  %v1008 = vld [vmem:[#allocation2] sm:$0x1]
  %1010 = vset.pattern.permute.xlu0 0
  %1011 = vperm.xlu0 %1010, %v1008
  %v1012 = vpop.permute.xlu0 %1011
  %v1014 = vperm.slane %v1012, 0
  %v1015 = vadd.f32 %v1007, %v1014
  %1016 = vst [vmem:[%s13] sm:$0x1] %v1015
  // Predicated region
  $region54: #{cnn_forward_pallas.1} parent=0 // pred_check
    _
  $region55: #{cnn_forward_pallas.1} parent=0 // pred_check_branch
    %1018 = sbr.rel (0) target = $region57
  $region56: #{cnn_forward_pallas.1} parent=0 // pred_region
    _
  $region57: #{cnn_forward_pallas.1} parent=0 // pred_fallthru
    _
  // Predicated region
  $region58: #{cnn_forward_pallas.1} parent=0 // pred_check
    _
  $region59: #{cnn_forward_pallas.1} parent=0 // pred_check_branch
    %1020 = sbr.rel (0) target = $region61
  $region60: #{cnn_forward_pallas.1} parent=0 // pred_region
    _
  $region61: #{cnn_forward_pallas.1} parent=0 // pred_fallthru
    _

</llo_original>
